<compile_context>
chip_gen: v5e
topology: v5e:2x2
jax: 0.10.0
libtpu: 0.0.40
codegen_flags: <defaults>
</compile_context>

<pallas_src>
import functools

import jax
import jax.numpy as jnp
from jax.experimental import pallas as pl
from jax.experimental.pallas import tpu as pltpu


def _ngram_encoder_kernel(x_ref, cb_ref, o_ref, *, levels, low, high, oper):
    TB, S = x_ref.shape
    SL = S * levels

    x = x_ref[...].astype(jnp.float32)                               # (TB, S)

    # ScatterCode quantization: value -> level index (f32 VPU math).
    normalized = (jnp.clip(x, low, high) - low) / (high - low)
    idx = jnp.round(normalized * (levels - 1)).astype(jnp.int32)     # (TB, S)

    # Target lane of the flattened pre-shifted codebook for position s.
    pos = jax.lax.broadcasted_iota(jnp.int32, (TB, S), 1)
    target = idx + levels * pos                                      # (TB, S)

    # (TB, S*L) one-hot via a short static loop of lane-broadcast compares
    # (S*L is lane-width friendly).  Accumulate as a boolean mask and convert
    # once for the MXU -- no per-step f32 adds / staging pass.
    lane = jax.lax.broadcasted_iota(jnp.int32, (TB, SL), 1)
    hit = lane == target[:, 0:1]
    for s in range(1, S):
        hit = jnp.logical_or(hit, lane == target[:, s:s + 1])
    one_hot = jnp.where(hit, 1.0, 0.0).astype(jnp.bfloat16)

    # Single MXU matmul: codebook gather + full sequence reduction fused.
    acc = jnp.dot(one_hot, cb_ref[...],
                  preferred_element_type=jnp.float32)                # (TB, TD)

    if oper == "bind":
        # acc == number of -1 factors per output lane (bipolar codebook);
        # the product of +/-1 values is +1 iff that count is even.
        parity = acc - 2.0 * jnp.floor(acc * 0.5)
        o_ref[...] = (1.0 - 2.0 * parity).astype(o_ref.dtype)
    else:                                                             # bundle
        o_ref[...] = acc.astype(o_ref.dtype)


_TILE_VMEM_BUDGET = 22 * 1024 * 1024   # double-buffered tile budget (all gens)
_CB_VMEM_BUDGET = 6 * 1024 * 1024      # of which: pre-shifted codebook budget
_VMEM_LIMIT = 32 * 1024 * 1024         # scoped VMEM limit passed to Mosaic


def ngram_encode(x, codebook, *, low, high, oper="bind", out_dtype=None):
    """x: (B, S) float, codebook: (levels, D) bipolar +/-1 -> (B, D)."""
    assert oper in ("bind", "bundle")
    B, S = x.shape
    L, D = codebook.shape
    SL = S * L

    if out_dtype is None:
        # bind outputs are exactly +/-1 and bundle outputs are integer sums
        # with |v| <= S: both exact in bf16 while S <= 256.  bf16 halves the
        # dominant HBM write traffic of this memory-bound kernel.
        out_dtype = jnp.bfloat16 if S <= 256 else jnp.float32
    out_bytes = jnp.dtype(out_dtype).itemsize

    # Fold the per-position permutation of bind/bundle_sequence into the
    # codebook once (S is small): row s*L + l of cb_flat is roll(cb[l], S-1-s).
    shifted = jnp.stack(
        [jnp.roll(codebook.astype(jnp.float32), (S - 1 - s) % D, axis=-1)
         for s in range(S)], axis=0)                                  # (S, L, D)
    if oper == "bind":
        # Negative-indicator form for the parity trick; requires a strictly
        # bipolar (+/-1) codebook (which ScatterCode produces).
        shifted = (1.0 - shifted) * 0.5
    cb_flat = shifted.reshape(SL, D).astype(jnp.bfloat16)

    # ---- Tile selection (budgeted so double-buffered tiles fit v7x VMEM) ----
    # Keep the whole pre-shifted codebook VMEM-resident when it is small;
    # otherwise tile D on 128-lane multiples (ragged last tile is handled by
    # pl.cdiv + Pallas masking).
    if 2 * SL * D * 2 <= _CB_VMEM_BUDGET:
        TD = D
    else:
        TD = max(128, (_CB_VMEM_BUDGET // (4 * SL) // 128) * 128)
    cb_vmem = 2 * SL * TD * 2
    # Batch tile: largest multiple of 8 sublanes whose double-buffered output
    # (+ x) tiles fit the remaining budget -> multi-MB output per grid step.
    per_row = 2 * (TD * out_bytes + S * 4)
    tb_fit = max(8, ((_TILE_VMEM_BUDGET - cb_vmem) // per_row // 8) * 8)
    TB = B if B <= tb_fit else tb_fit

    n_b, n_d = pl.cdiv(B, TB), pl.cdiv(D, TD)
    # v7x megacore: never leave the grid at a single step -- split the leading
    # axis so both TensorCores get work (irrelevant on single-TC v5e/v6e).
    if n_b * n_d < 2:
        if D >= 256:
            TD = max(128, ((D + 1) // 2 // 128) * 128)
        elif B >= 16:
            TB = max(8, ((B + 1) // 2 // 8) * 8)
        n_b, n_d = pl.cdiv(B, TB), pl.cdiv(D, TD)

    # Grid ordering: when D is tiled, make B the innermost (fastest) axis so
    # the codebook block index is constant between consecutive steps and
    # Pallas skips its re-DMA; when the codebook is fully resident (n_d == 1)
    # lead with B so the batch tiles shard across TensorCores.
    if n_d >= 2:
        grid = (n_d, n_b)
        x_spec = pl.BlockSpec((TB, S), lambda j, i: (i, 0))
        cb_spec = pl.BlockSpec((SL, TD), lambda j, i: (0, j))
        out_spec = pl.BlockSpec((TB, TD), lambda j, i: (i, j))
    else:
        grid = (n_b, n_d)
        x_spec = pl.BlockSpec((TB, S), lambda i, j: (i, 0))
        cb_spec = pl.BlockSpec((SL, TD), lambda i, j: (0, j))
        out_spec = pl.BlockSpec((TB, TD), lambda i, j: (i, j))

    kernel = functools.partial(
        _ngram_encoder_kernel, levels=L, low=float(low), high=float(high),
        oper=oper)

    # Codebook is fetched once per D tile (block index constant across the
    # inner B steps); x is (cheaply) re-read once per D tile.
    cost = pl.CostEstimate(
        flops=2 * B * SL * D,
        transcendentals=0,
        bytes_accessed=SL * D * 2 + n_d * B * S * 4 + B * D * out_bytes)

    return pl.pallas_call(
        kernel,
        out_shape=jax.ShapeDtypeStruct((B, D), out_dtype),
        grid=grid,
        in_specs=[x_spec, cb_spec],
        out_specs=out_spec,
        compiler_params=pltpu.CompilerParams(
            dimension_semantics=("parallel", "parallel"),
            vmem_limit_bytes=_VMEM_LIMIT),
        cost_estimate=cost,
    )(x.astype(jnp.float32), cb_flat)


def _ngram_encode_ref(x, codebook, *, low, high, oper):
    """Pure-JAX reference of the original forward pass (hard level lookup)."""
    B, S = x.shape
    L, D = codebook.shape
    normalized = (jnp.clip(x, low, high) - low) / (high - low)
    idx = jnp.round(normalized * (L - 1)).astype(jnp.int32)
    hv = codebook[idx]                                                # (B, S, D)
    rolled = jnp.stack(
        [jnp.roll(hv[:, s, :], (S - 1 - s) % D, axis=-1) for s in range(S)],
        axis=1)
    if oper == "bind":
        return jnp.prod(rolled, axis=1)
    return jnp.sum(rolled, axis=1)


if __name__ == "__main__":
    key = jax.random.PRNGKey(0)
    k_cb, k_x = jax.random.split(key)

    # Module hyper-params (small, deterministic, in-script).
    B, S = 8, 8                 # batch of sequences of 8 scalar features
    levels = 16                 # ScatterCode quantization levels
    out_features = 256          # hypervector dimensionality D
    low, high = 0.0, 1.0

    # ScatterCode codebook: random bipolar (+/-1) level hypervectors.
    # TODO(synk): torch-side RNG of ScatterCode is reproduced with jax.random.
    codebook = jnp.where(
        jax.random.bernoulli(k_cb, 0.5, (levels, out_features)),
        1.0, -1.0).astype(jnp.float32)

    x = jax.random.uniform(k_x, (B, S), minval=low, maxval=high,
                           dtype=jnp.float32)

    out_bind = ngram_encode(x, codebook, low=low, high=high, oper="bind")
    out_bundle = ngram_encode(x, codebook, low=low, high=high, oper="bundle")
    jax.block_until_ready((out_bind, out_bundle))

    ref_bind = _ngram_encode_ref(x, codebook, low=low, high=high, oper="bind")
    ref_bundle = _ngram_encode_ref(x, codebook, low=low, high=high,
                                   oper="bundle")

    assert out_bind.shape == (B, out_features)
    assert out_bundle.shape == (B, out_features)
    # bind values are exactly +/-1 and bundle values are small integers, so
    # the bf16 kernel outputs must match the f32 reference exactly.
    assert jnp.allclose(out_bind.astype(jnp.float32), ref_bind), \
        "bind mismatch vs reference"
    assert jnp.allclose(out_bundle.astype(jnp.float32), ref_bundle), \
        "bundle mismatch vs reference"
    print("KERNEL_OK")
</pallas_src>

<mosaic_0001>
module attributes {stable_mosaic.version = 11 : i64} {
  func.func @_ngram_encoder_kernel(%arg0: i32, %arg1: i32, %arg2: memref<8x8xf32, #tpu.memory_space<vmem>>, %arg3: memref<128x128xbf16, #tpu.memory_space<vmem>>, %arg4: memref<8x128xbf16, #tpu.memory_space<vmem>>) attributes {dimension_semantics = [#tpu.dimension_semantics<parallel>, #tpu.dimension_semantics<parallel>], iteration_bounds = array<i64: 2, 1>, scalar_prefetch = 0 : i64, scratch_operands = 0 : i64, tpu.core_type = #tpu.core_type<tc>, window_params = [{transform_indices = @transform_0, window_bounds = array<i64: 8, 8>}, {transform_indices = @transform_1, window_bounds = array<i64: 128, 128>}, {transform_indices = @transform_2, window_bounds = array<i64: 8, 128>}]} {
    %c0 = arith.constant 0 : index
    %c0_0 = arith.constant 0 : index
    %0 = vector.load %arg2[%c0, %c0_0] : memref<8x8xf32, #tpu.memory_space<vmem>>, vector<8x8xf32>
    %cst = arith.constant 0.000000e+00 : f32
    %cst_1 = arith.constant 1.000000e+00 : f32
    %1 = vector.broadcast %cst : f32 to vector<8x8xf32>
    %2 = arith.maximumf %1, %0 : vector<8x8xf32>
    %3 = vector.broadcast %cst_1 : f32 to vector<8x8xf32>
    %4 = arith.minimumf %3, %2 : vector<8x8xf32>
    %cst_2 = arith.constant 0.000000e+00 : f32
    %5 = vector.broadcast %cst_2 : f32 to vector<8x8xf32>
    %6 = arith.subf %4, %5 : vector<8x8xf32>
    %cst_3 = arith.constant 1.000000e+00 : f32
    %7 = vector.broadcast %cst_3 : f32 to vector<8x8xf32>
    %8 = arith.divf %6, %7 : vector<8x8xf32>
    %cst_4 = arith.constant 1.500000e+01 : f32
    %9 = vector.broadcast %cst_4 : f32 to vector<8x8xf32>
    %10 = arith.mulf %8, %9 : vector<8x8xf32>
    %11 = math.roundeven %10 : vector<8x8xf32>
    %12 = arith.fptosi %11 : vector<8x8xf32> to vector<8x8xi32>
    %13 = tpu.iota {dimensions = array<i32: 1>} : vector<8x8xi32>
    %c16_i32 = arith.constant 16 : i32
    %14 = vector.broadcast %c16_i32 : i32 to vector<8x8xi32>
    %15 = arith.muli %14, %13 : vector<8x8xi32>
    %16 = arith.addi %12, %15 : vector<8x8xi32>
    %17 = tpu.iota {dimensions = array<i32: 1>} : vector<8x128xi32>
    %18 = vector.extract_strided_slice %16 {offsets = [0, 0], sizes = [8, 1], strides = [1, 1]} : vector<8x8xi32> to vector<8x1xi32>
    %19 = vector.broadcast %18 : vector<8x1xi32> to vector<8x128xi32>
    %20 = arith.cmpi eq, %17, %19 : vector<8x128xi32>
    %21 = vector.extract_strided_slice %16 {offsets = [0, 1], sizes = [8, 1], strides = [1, 1]} : vector<8x8xi32> to vector<8x1xi32>
    %22 = vector.broadcast %21 : vector<8x1xi32> to vector<8x128xi32>
    %23 = arith.cmpi eq, %17, %22 : vector<8x128xi32>
    %24 = arith.ori %20, %23 : vector<8x128xi1>
    %25 = vector.extract_strided_slice %16 {offsets = [0, 2], sizes = [8, 1], strides = [1, 1]} : vector<8x8xi32> to vector<8x1xi32>
    %26 = vector.broadcast %25 : vector<8x1xi32> to vector<8x128xi32>
    %27 = arith.cmpi eq, %17, %26 : vector<8x128xi32>
    %28 = arith.ori %24, %27 : vector<8x128xi1>
    %29 = vector.extract_strided_slice %16 {offsets = [0, 3], sizes = [8, 1], strides = [1, 1]} : vector<8x8xi32> to vector<8x1xi32>
    %30 = vector.broadcast %29 : vector<8x1xi32> to vector<8x128xi32>
    %31 = arith.cmpi eq, %17, %30 : vector<8x128xi32>
    %32 = arith.ori %28, %31 : vector<8x128xi1>
    %33 = vector.extract_strided_slice %16 {offsets = [0, 4], sizes = [8, 1], strides = [1, 1]} : vector<8x8xi32> to vector<8x1xi32>
    %34 = vector.broadcast %33 : vector<8x1xi32> to vector<8x128xi32>
    %35 = arith.cmpi eq, %17, %34 : vector<8x128xi32>
    %36 = arith.ori %32, %35 : vector<8x128xi1>
    %37 = vector.extract_strided_slice %16 {offsets = [0, 5], sizes = [8, 1], strides = [1, 1]} : vector<8x8xi32> to vector<8x1xi32>
    %38 = vector.broadcast %37 : vector<8x1xi32> to vector<8x128xi32>
    %39 = arith.cmpi eq, %17, %38 : vector<8x128xi32>
    %40 = arith.ori %36, %39 : vector<8x128xi1>
    %41 = vector.extract_strided_slice %16 {offsets = [0, 6], sizes = [8, 1], strides = [1, 1]} : vector<8x8xi32> to vector<8x1xi32>
    %42 = vector.broadcast %41 : vector<8x1xi32> to vector<8x128xi32>
    %43 = arith.cmpi eq, %17, %42 : vector<8x128xi32>
    %44 = arith.ori %40, %43 : vector<8x128xi1>
    %45 = vector.extract_strided_slice %16 {offsets = [0, 7], sizes = [8, 1], strides = [1, 1]} : vector<8x8xi32> to vector<8x1xi32>
    %46 = vector.broadcast %45 : vector<8x1xi32> to vector<8x128xi32>
    %47 = arith.cmpi eq, %17, %46 : vector<8x128xi32>
    %48 = arith.ori %44, %47 : vector<8x128xi1>
    %cst_5 = arith.constant 1.000000e+00 : f32
    %cst_6 = arith.constant 0.000000e+00 : f32
    %49 = vector.broadcast %cst_5 : f32 to vector<8x128xf32>
    %50 = vector.broadcast %cst_6 : f32 to vector<8x128xf32>
    %51 = arith.select %48, %49, %50 : vector<8x128xi1>, vector<8x128xf32>
    %52 = arith.truncf %51 : vector<8x128xf32> to vector<8x128xbf16>
    %c0_7 = arith.constant 0 : index
    %c0_8 = arith.constant 0 : index
    %53 = vector.load %arg3[%c0_7, %c0_8] : memref<128x128xbf16, #tpu.memory_space<vmem>>, vector<128x128xbf16>
    %cst_9 = arith.constant dense<0.000000e+00> : vector<8x128xf32>
    %54 = tpu.matmul %52, %53, %cst_9 {dimension_numbers = #tpu.dot_dimension_numbers<[1], [0], [0], [1], [0, 0, 1, 1], [], []>} : vector<8x128xbf16>, vector<128x128xbf16>, vector<8x128xf32> -> vector<8x128xf32>
    %cst_10 = arith.constant 5.000000e-01 : f32
    %55 = vector.broadcast %cst_10 : f32 to vector<8x128xf32>
    %56 = arith.mulf %54, %55 : vector<8x128xf32>
    %57 = math.floor %56 : vector<8x128xf32>
    %cst_11 = arith.constant 2.000000e+00 : f32
    %58 = vector.broadcast %cst_11 : f32 to vector<8x128xf32>
    %59 = arith.mulf %58, %57 : vector<8x128xf32>
    %60 = arith.subf %54, %59 : vector<8x128xf32>
    %cst_12 = arith.constant 2.000000e+00 : f32
    %61 = vector.broadcast %cst_12 : f32 to vector<8x128xf32>
    %62 = arith.mulf %61, %60 : vector<8x128xf32>
    %cst_13 = arith.constant 1.000000e+00 : f32
    %63 = vector.broadcast %cst_13 : f32 to vector<8x128xf32>
    %64 = arith.subf %63, %62 : vector<8x128xf32>
    %65 = arith.truncf %64 : vector<8x128xf32> to vector<8x128xbf16>
    %c0_14 = arith.constant 0 : index
    %c0_15 = arith.constant 0 : index
    %66 = vector.load %arg4[%c0_14, %c0_15] : memref<8x128xbf16, #tpu.memory_space<vmem>>, vector<8x128xbf16>
    tpu.vector_store %arg4[%c0_14, %c0_15], %65 {strides = array<i32>} : memref<8x128xbf16, #tpu.memory_space<vmem>>, vector<8x128xbf16>,
    return
  }
  func.func @transform_0(%arg0: i32, %arg1: i32) -> (i32, i32) {
    %c0_i32 = arith.constant 0 : i32
    %c0_i32_0 = arith.constant 0 : i32
    return %arg1, %c0_i32 : i32, i32
  }
  func.func @transform_1(%arg0: i32, %arg1: i32) -> (i32, i32) {
    %c0_i32 = arith.constant 0 : i32
    %c0_i32_0 = arith.constant 0 : i32
    return %c0_i32, %arg0 : i32, i32
  }
  func.func @transform_2(%arg0: i32, %arg1: i32) -> (i32, i32) {
    %c0_i32 = arith.constant 0 : i32
    return %arg1, %arg0 : i32, i32
  }
}

</mosaic_0001>

<llo_original>
// kernel: tpu_custom_call.1
$region0: #{tpu_custom_call.1}
  #allocation0 [shape = 'u32[]', space=smem, size = 0x4, offset = 0x4, fixed_abs, tag = 'smem constant byte address 0x4 - core index']
  #allocation1 [shape = 'u32[72,128]{1,0:T(1,128)}', space=vmem, size = 0x9000, scoped, tag = 'internal scratch']
  %s0 = inlined_call_operand.hbm [shape: f32[8,8], index: 0, kind: input, shape index: {}]
  %s1 = inlined_call_operand.hbm [shape: bf16[128,256], index: 1, kind: input, shape index: {}]
  %s2 = inlined_call_operand.hbm [shape: bf16[8,256], index: 2, kind: output, shape index: {}]
  %s3 = sld [smem:[#allocation0]]
  $region49: #{tpu_custom_call.1} parent=0
    _
  %s5 = ssub.s32 1, %s3
  %s6 = scalar_select 0, %s5, %s3
  $region1: #{tpu_custom_call.1} parent=0
    #allocation2 [shape = 'u8[4096]{0}', space=vmem, size = 0x1000, scoped, tag = 'input window, operand 0, single buffered']
    #allocation3 [shape = 's32[2]{0}', space=sflag, size = 0x8, scoped, tag = 'scoped memory for tpu_custom_call.1']
    #allocation4 [shape = 's32[2]{0}', space=sflag, size = 0x8, scoped, tag = 'scoped memory for tpu_custom_call.1']
    #allocation5 [shape = 'u8[65536]{0}', space=vmem, size = 0x10000, scoped, tag = 'input window, operand 1']
    #allocation6 [shape = 's32[2]{0}', space=sflag, size = 0x8, scoped, tag = 'scoped memory for tpu_custom_call.1']
    #allocation7 [shape = 'u8[4096]{0}', space=vmem, size = 0x1000, scoped, tag = 'output window, operand 0']
    %7 = vsyncpa [#allocation3], 0
    %8 = vsyncpa [#allocation6], 0
    %s9 = scalar_lea.sflag [#allocation6], 1
    %10 = vsyncpa %s9, 0
    %11 = vsyncpa [#allocation4], 0
    %s12 = scalar_lea.sflag [#allocation4], 1
    %13 = vsyncpa %s12, 0
    loop: start=0, step=1, limit=4
    $region2: #{tpu_custom_call.1} parent=1 // loop_pre_header
      _
    $region3: #{tpu_custom_call.1} parent=1 // loop_header
      %s15 = sphi 0, %s19
      %p16 = scmp.ge.s32.totalorder %s15, 4
      %s22 = sphi 0, %s34
      %s23 = sphi 0, %s30
      %s24 = sphi 0, %s22
      %s25 = sphi 0, %s23
      %s26 = sphi 0, %s24
      %s27 = sphi 0, %s25
      %s37 = sphi 0, %s39
      %s40 = sphi 0, %s37
      %s41 = sphi 0, %s40
      %s57 = sphi 0, %s41
      %s63 = sphi 0, %s65
      %s66 = sphi 0, %s63
      %s67 = sphi 0, %s66
      %s83 = sphi 0, %s67
      %s91 = sphi 0, %s93
      %s94 = sphi 0, %s91
      %s95 = sphi 0, %s94
      %s111 = sphi 0, %s95
    $region4: #{tpu_custom_call.1} parent=1 // loop_header_branch
      %18 = sbr.rel (%p16) target = $region8
    $region5: #{tpu_custom_call.1} parent=1 // loop_body
      %s20 = ssub.s32 %s15, 1
      %s21 = ssub.s32 %s15, 2
      %s28 = sadd.s32 1, %s23
      %p29 = scmp.ge.s32.totalorder %s28, 1
      %s30 = scalar_select %p29, 0, %s28
      %s31 = sadd.s32 1, %s22
      %s32 = scalar_select %p29, %s31, %s22
      %p33 = scmp.ge.s32.totalorder %s32, 2
      %s34 = scalar_select %p33, 0, %s32
      %s35 = ssub.s32 %s23, %s30
      %p36 = scmp.eq.s32.totalorder %s35, 0
      %s38 = sadd.s32 %s37, 1
      %s39 = scalar_select %p36, %s37, %s38
      %p42 = pneg %p36
      %p43 = scmp.eq.s32.totalorder %s15, 1
      %p44 = por %p42, %p43
      %p45 = scmp.ne.s32.totalorder %s37, %s40
      %p46 = scmp.eq.s32.totalorder %s15, 0
      %p47 = por %p45, %p46
      %p48 = scmp.ne.s32.totalorder %s37, %s40
      %p49 = scmp.eq.s32.totalorder %s20, 1
      %p50 = por %p48, %p49
      %p51 = scmp.ne.s32.totalorder %s40, %s41
      %p52 = scmp.eq.s32.totalorder %s20, 0
      %p53 = por %p51, %p52
      %p54 = scmp.ne.s32.totalorder %s40, %s41
      %p55 = scmp.eq.s32.totalorder %s21, 1
      %p56 = por %p54, %p55
      %p58 = scmp.ne.s32.totalorder %s41, %s57
      %p59 = scmp.eq.s32.totalorder %s21, 0
      %p60 = por %p58, %p59
      %s61 = ssub.s32 %s22, %s34
      %p62 = scmp.eq.s32.totalorder %s61, 0
      %s64 = sadd.s32 %s63, 1
      %s65 = scalar_select %p62, %s63, %s64
      %p68 = pneg %p62
      %p69 = scmp.eq.s32.totalorder %s15, 1
      %p70 = por %p68, %p69
      %p71 = scmp.ne.s32.totalorder %s63, %s66
      %p72 = scmp.eq.s32.totalorder %s15, 0
      %p73 = por %p71, %p72
      %p74 = scmp.ne.s32.totalorder %s63, %s66
      %p75 = scmp.eq.s32.totalorder %s20, 1
      %p76 = por %p74, %p75
      %p77 = scmp.ne.s32.totalorder %s66, %s67
      %p78 = scmp.eq.s32.totalorder %s20, 0
      %p79 = por %p77, %p78
      %p80 = scmp.ne.s32.totalorder %s66, %s67
      %p81 = scmp.eq.s32.totalorder %s21, 1
      %p82 = por %p80, %p81
      %p84 = scmp.ne.s32.totalorder %s67, %s83
      %p85 = scmp.eq.s32.totalorder %s21, 0
      %p86 = por %p84, %p85
      %s87 = ssub.s32 %s23, %s30
      %s88 = ssub.s32 %s22, %s34
      %s89 = sor.u32 %s87, %s88
      %p90 = scmp.eq.s32.totalorder %s89, 0
      %s92 = sadd.s32 %s91, 1
      %s93 = scalar_select %p90, %s91, %s92
      %p96 = pneg %p90
      %p97 = scmp.eq.s32.totalorder %s15, 1
      %p98 = por %p96, %p97
      %p99 = scmp.ne.s32.totalorder %s91, %s94
      %p100 = scmp.eq.s32.totalorder %s15, 0
      %p101 = por %p99, %p100
      %p102 = scmp.ne.s32.totalorder %s91, %s94
      %p103 = scmp.eq.s32.totalorder %s20, 1
      %p104 = por %p102, %p103
      %p105 = scmp.ne.s32.totalorder %s94, %s95
      %p106 = scmp.eq.s32.totalorder %s20, 0
      %p107 = por %p105, %p106
      %p108 = scmp.ne.s32.totalorder %s94, %s95
      %p109 = scmp.eq.s32.totalorder %s21, 1
      %p110 = por %p108, %p109
      %p112 = scmp.ne.s32.totalorder %s95, %s111
      %p113 = scmp.eq.s32.totalorder %s21, 0
      %p114 = por %p112, %p113
      %p115 = scmp.le.s32.totalorder 1, %s15
      %p116 = scmp.lt.s32.totalorder %s15, 3
      %p117 = pnand %p115, %p116
      %p118 = pneg %p117
      // Predicated region
      $region9: #{tpu_custom_call.1} parent=5 // pred_check
        _
      $region10: #{tpu_custom_call.1} parent=5 // pred_check_branch
        %120 = sbr.rel (%p117) target = $region12
      $region11: #{tpu_custom_call.1} parent=5 // pred_region
        %s121 = ssub.s32 %s15, 1
        // Predicated region
        $region13: #{tpu_custom_call.1} parent=11 // pred_check
          %p122 = pneg %p53
        $region14: #{tpu_custom_call.1} parent=11 // pred_check_branch
          %124 = sbr.rel (%p122) target = $region16
        $region15: #{tpu_custom_call.1} parent=11 // pred_region
          %126 = vsyncadd [#allocation3], 0
          %s127 = smul.addr %s25, 8
          %s128 = scalar_lea.hbm %s0, %s127
          %s130 = sshll.u32 %s128, 4
          %s131 = int_to_ptr.hbm [resolvable:$true] %s130
          %s132 = sshll.u32 [#allocation2], 4
          %s133 = int_to_ptr.vmem [resolvable:$true] %s132
          %135 = dma.hbm_to_vmem [thread:$0]  %s131, 128, %s133, [#allocation3]
        $region16: #{tpu_custom_call.1} parent=11 // pred_fallthru
          _
      $region12: #{tpu_custom_call.1} parent=5 // pred_fallthru
        _
      %p136 = scmp.lt.s32.totalorder %s15, 2
      // Predicated region
      $region17: #{tpu_custom_call.1} parent=5 // pred_check
        %p137 = pneg %p136
      $region18: #{tpu_custom_call.1} parent=5 // pred_check_branch
        %139 = sbr.rel (%p137) target = $region20
      $region19: #{tpu_custom_call.1} parent=5 // pred_region
        // Predicated region
        $region21: #{tpu_custom_call.1} parent=19 // pred_check
          %p140 = pneg %p73
        $region22: #{tpu_custom_call.1} parent=19 // pred_check_branch
          %142 = sbr.rel (%p140) target = $region24
        $region23: #{tpu_custom_call.1} parent=19 // pred_region
          %s143 = sand.u32 %s63, 1
          %s144 = scalar_lea.sflag [#allocation6], %s143
          %s145 = sand.u32 %s63, 1
          %s146 = smul.addr %s145, 64
          %s147 = scalar_lea.vmem [#allocation5], %s146
          %149 = vsyncadd %s144, 0
          %s150 = smul.addr %s22, 4
          %s151 = scalar_lea.hbm %s1, %s150
          %s152 = sshll.u32 %s151, 4
          %s153 = int_to_ptr.hbm [resolvable:$true] %s152
          %s154 = sshll.u32 %s147, 4
          %s155 = int_to_ptr.vmem [resolvable:$true] %s154
          %160 = dma.hbm_to_vmem [thread:$0]  %s153, 1024, %s155, %s144, 128, 64, 4
        $region24: #{tpu_custom_call.1} parent=19 // pred_fallthru
          _
      $region20: #{tpu_custom_call.1} parent=5 // pred_fallthru
        _
      %p161 = scmp.le.s32.totalorder 1, %s15
      %p162 = scmp.lt.s32.totalorder %s15, 3
      %p163 = pnand %p161, %p162
      %p164 = pneg %p163
      // Predicated region
      $region25: #{tpu_custom_call.1} parent=5 // pred_check
        _
      $region26: #{tpu_custom_call.1} parent=5 // pred_check_branch
        %166 = sbr.rel (%p163) target = $region28
      $region27: #{tpu_custom_call.1} parent=5 // pred_region
        %s167 = ssub.s32 %s15, 1
        // Predicated region
        $region29: #{tpu_custom_call.1} parent=27 // pred_check
          %p168 = pneg %p53
        $region30: #{tpu_custom_call.1} parent=27 // pred_check_branch
          %170 = sbr.rel (%p168) target = $region32
        $region31: #{tpu_custom_call.1} parent=27 // pred_region
          %172 = dma.done [#allocation3], 128
        $region32: #{tpu_custom_call.1} parent=27 // pred_fallthru
          _
        %s173 = sand.u32 %s66, 1
        %s174 = scalar_lea.sflag [#allocation6], %s173
        %s175 = sand.u32 %s66, 1
        %s176 = smul.addr %s175, 64
        %s177 = scalar_lea.vmem [#allocation5], %s176
        // Predicated region
        $region33: #{tpu_custom_call.1} parent=27 // pred_check
          %p178 = pneg %p79
        $region34: #{tpu_custom_call.1} parent=27 // pred_check_branch
          %180 = sbr.rel (%p178) target = $region36
        $region35: #{tpu_custom_call.1} parent=27 // pred_region
          %182 = dma.done %s174, 1024
        $region36: #{tpu_custom_call.1} parent=27 // pred_fallthru
          _
        %p183 = pneg %p53
        %p184 = pneg %p50
        %s185 = sand.u32 %s66, 1
        %s186 = scalar_lea.sflag [#allocation6], %s185
        %s187 = sand.u32 %s66, 1
        %s188 = smul.addr %s187, 64
        %s189 = scalar_lea.vmem [#allocation5], %s188
        %p190 = pneg %p79
        %p191 = pneg %p76
        %p192 = pneg %p107
        %p193 = pneg %p104
        %s194 = sand.u32 %s94, 1
        %s195 = scalar_lea.sflag [#allocation4], %s194
        %s196 = sand.u32 %s94, 1
        %s197 = smul.addr %s196, 4
        %s198 = scalar_lea.vmem [#allocation7], %s197
        %v199 = vld [vmem:[#allocation2] sm:$0xff]
        %v200 = vmax.f32 %v199, 0.0
        %v201 = vmin.f32 %v200, 1.0
        %v202 = vmul.f32 %v201, 15.0
        %v203 = vcvt.f32.s32.ties.to.even %v202
        %v204 = vlaneseq
        %v205 = vand.u32 %v204, 127
        %v206 = vmul.u32 %v205, 16
        %v207 = vadd.s32 %v203, %v206
        %208 = vset.pattern.permute.xlu0 0
        %209 = vperm.xlu0 %208, %v207
        %v210 = vpop.permute.xlu0 %209
        %vm211 = vcmp.eq.s32.totalorder %v205, %v210
        %212 = vset.pattern.permute.xlu0 1
        %213 = vperm.xlu0 %212, %v207
        %v214 = vpop.permute.xlu0 %213
        %vm215 = vcmp.eq.s32.totalorder %v205, %v214
        %vm216 = vmor %vm211, %vm215
        %217 = vset.pattern.permute.xlu0 2
        %218 = vperm.xlu0 %217, %v207
        %v219 = vpop.permute.xlu0 %218
        %vm220 = vcmp.eq.s32.totalorder %v205, %v219
        %vm221 = vmor %vm216, %vm220
        %222 = vset.pattern.permute.xlu0 3
        %223 = vperm.xlu0 %222, %v207
        %v224 = vpop.permute.xlu0 %223
        %vm225 = vcmp.eq.s32.totalorder %v205, %v224
        %vm226 = vmor %vm221, %vm225
        %227 = vset.pattern.permute.xlu0 4
        %228 = vperm.xlu0 %227, %v207
        %v229 = vpop.permute.xlu0 %228
        %vm230 = vcmp.eq.s32.totalorder %v205, %v229
        %vm231 = vmor %vm226, %vm230
        %232 = vset.pattern.permute.xlu0 5
        %233 = vperm.xlu0 %232, %v207
        %v234 = vpop.permute.xlu0 %233
        %vm235 = vcmp.eq.s32.totalorder %v205, %v234
        %vm236 = vmor %vm231, %vm235
        %237 = vset.pattern.permute.xlu0 6
        %238 = vperm.xlu0 %237, %v207
        %v239 = vpop.permute.xlu0 %238
        %vm240 = vcmp.eq.s32.totalorder %v205, %v239
        %vm241 = vmor %vm236, %vm240
        %242 = vset.pattern.permute.xlu0 7
        %243 = vperm.xlu0 %242, %v207
        %v244 = vpop.permute.xlu0 %243
        %vm245 = vcmp.eq.s32.totalorder %v205, %v244
        %vm246 = vmor %vm241, %vm245
        %v247 = vsel %vm246, 1.0, 0.0
        %v248 = vpack.c.bf16 %v247, %v247
        %v249 = vld [vmem:[%s177] sm:$0xf]
        %v250 = vld [vmem:[%s177 + $0x4] sm:$0xf]
        %v251 = vld [vmem:[%s177 + $0x8] sm:$0xf]
        %v252 = vld [vmem:[%s177 + $0xc] sm:$0xf]
        %v253 = vld [vmem:[%s177 + $0x10] sm:$0xf]
        %v254 = vld [vmem:[%s177 + $0x14] sm:$0xf]
        %v255 = vld [vmem:[%s177 + $0x18] sm:$0xf]
        %v256 = vld [vmem:[%s177 + $0x1c] sm:$0xf]
        %v257 = vld [vmem:[%s177 + $0x20] sm:$0xf]
        %v258 = vld [vmem:[%s177 + $0x24] sm:$0xf]
        %v259 = vld [vmem:[%s177 + $0x28] sm:$0xf]
        %v260 = vld [vmem:[%s177 + $0x2c] sm:$0xf]
        %v261 = vld [vmem:[%s177 + $0x30] sm:$0xf]
        %v262 = vld [vmem:[%s177 + $0x34] sm:$0xf]
        %v263 = vld [vmem:[%s177 + $0x38] sm:$0xf]
        %v264 = vld [vmem:[%s177 + $0x3c] sm:$0xf]
        %v281 = vunpack.c.l.b16 %v249
        %v282 = vunpack.c.l.b16 %v250
        %v283 = vunpack.c.l.b16 %v251
        %v284 = vunpack.c.l.b16 %v252
        %v285 = vunpack.c.l.b16 %v253
        %v286 = vunpack.c.l.b16 %v254
        %v287 = vunpack.c.l.b16 %v255
        %v288 = vunpack.c.l.b16 %v256
        %v289 = vunpack.c.l.b16 %v257
        %v290 = vunpack.c.l.b16 %v258
        %v291 = vunpack.c.l.b16 %v259
        %v292 = vunpack.c.l.b16 %v260
        %v293 = vunpack.c.l.b16 %v261
        %v294 = vunpack.c.l.b16 %v262
        %v295 = vunpack.c.l.b16 %v263
        %v296 = vunpack.c.l.b16 %v264
        %v297 = vpack.c.b16 %v282, %v281
        %v298 = vpack.c.b16 %v284, %v283
        %v299 = vpack.c.b16 %v286, %v285
        %v300 = vpack.c.b16 %v288, %v287
        %v301 = vpack.c.b16 %v290, %v289
        %v302 = vpack.c.b16 %v292, %v291
        %v303 = vpack.c.b16 %v294, %v293
        %v304 = vpack.c.b16 %v296, %v295
        %313 = vmatpush.bf16.msra.mxu0 %v304
        %314 = vmatpush.bf16.msra.mxu0 %v303
        %315 = vmatpush.bf16.msra.mxu0 %v302
        %316 = vmatpush.bf16.msra.mxu0 %v301
        %317 = vmatpush.bf16.msra.mxu0 %v300
        %318 = vmatpush.bf16.msra.mxu0 %v299
        %319 = vmatpush.bf16.msra.mxu0 %v298
        %320 = vmatpush.bf16.msra.mxu0 %v297
        %321 = vmatmul.bf16.gmra.mxu0 %v248
        %v322 = vpop.f32.mrf.mxu0
        %v323 = vadd.f32 0.0, %v322
        %v324 = vpop.f32.mrf.mxu0
        %325 = vdwg.mxu0
        %v326 = vmul.f32 %v323, 0.5
        %v327 = vfloor.f32 %v326
        %v328 = vmul.f32 %v327, 2.0
        %v329 = vsub.f32 %v323, %v328
        %v330 = vmul.f32 %v329, 2.0
        %v331 = vsub.f32 1.0, %v330
        %v332 = vpack.c.bf16 %v331, %v331
        %333 = vst [vmem:[%s198] sm:$0xf] %v332
        %s334 = sand.u32 %s94, 1
        %s335 = scalar_lea.sflag [#allocation4], %s334
        %s336 = sand.u32 %s94, 1
        %s337 = smul.addr %s336, 4
        %s338 = scalar_lea.vmem [#allocation7], %s337
        // Predicated region
        $region37: #{tpu_custom_call.1} parent=27 // pred_check
          %p339 = pneg %p104
        $region38: #{tpu_custom_call.1} parent=27 // pred_check_branch
          %341 = sbr.rel (%p339) target = $region40
        $region39: #{tpu_custom_call.1} parent=27 // pred_region
          %343 = vsyncadd %s335, 0
          %s344 = smul.addr %s25, 2
          %s345 = sadd.s32 %s24, %s344
          %s346 = smul.addr %s345, 4
          %s347 = scalar_lea.hbm %s2, %s346
          %s349 = sshll.u32 %s338, 4
          %s350 = int_to_ptr.vmem [resolvable:$true] %s349
          %s351 = sshll.u32 %s347, 4
          %s352 = int_to_ptr.hbm [resolvable:$true] %s351
          %354 = dma.vmem_to_hbm [thread:$0]  %s350, 64, %s352, %s335
        $region40: #{tpu_custom_call.1} parent=27 // pred_fallthru
          _
      $region28: #{tpu_custom_call.1} parent=5 // pred_fallthru
        _
      %p355 = scmp.le.s32.totalorder 2, %s15
      // Predicated region
      $region41: #{tpu_custom_call.1} parent=5 // pred_check
        %p356 = pneg %p355
      $region42: #{tpu_custom_call.1} parent=5 // pred_check_branch
        %358 = sbr.rel (%p356) target = $region44
      $region43: #{tpu_custom_call.1} parent=5 // pred_region
        %s359 = ssub.s32 %s15, 2
        // Predicated region
        $region45: #{tpu_custom_call.1} parent=43 // pred_check
          %p360 = pneg %p110
        $region46: #{tpu_custom_call.1} parent=43 // pred_check_branch
          %362 = sbr.rel (%p360) target = $region48
        $region47: #{tpu_custom_call.1} parent=43 // pred_region
          %s363 = sand.u32 %s95, 1
          %s364 = scalar_lea.sflag [#allocation4], %s363
          %s365 = sand.u32 %s95, 1
          %s366 = smul.addr %s365, 4
          %s367 = scalar_lea.vmem [#allocation7], %s366
          %369 = dma.done %s364, 64
        $region48: #{tpu_custom_call.1} parent=43 // pred_fallthru
          _
      $region44: #{tpu_custom_call.1} parent=5 // pred_fallthru
        _
    $region6: #{tpu_custom_call.1} parent=1 // loop_footer
      %s19 = sadd.s32 1, %s15
    $region7: #{tpu_custom_call.1} parent=1 // loop_footer_branch
      %14 = sbr.rel target = $region3
    $region8: #{tpu_custom_call.1} parent=1 // loop_exit
      _
    %370 = vsyncpa [#allocation3], 1
    %s371 = scalar_lea.sflag [#allocation3], 1
    %372 = vsyncpa %s371, 1
    %373 = vsyncpa [#allocation6], 1
    %s374 = scalar_lea.sflag [#allocation6], 1
    %375 = vsyncpa %s374, 1
    %376 = vsyncpa [#allocation4], 1
    %s377 = scalar_lea.sflag [#allocation4], 1
    %378 = vsyncpa %s377, 1

</llo_original>
